<compile_context>
chip_gen: v7x
topology: tpu7x:2x2x1
jax: 0.10.0
libtpu: 0.0.40
codegen_flags: <defaults>
</compile_context>

<pallas_src>
import functools

import jax
import jax.numpy as jnp
from jax.experimental import pallas as pl
from jax.experimental.pallas import tpu as pltpu

_LANE = 128
_SUBLANE = 8


def _ce_kernel(logits_ref, tgt_ref, loss_ref, *, ignore_index):
    # logits_ref: (1, C, ts, 128)  model dtype (f32 / bf16)
    # tgt_ref:    (1, 1, ts, 128)  int32 class indices
    # loss_ref:   (1, 1, ts, 128)  f32 per-pixel CE (0 where target == ignore_index)
    x = logits_ref[0].astype(jnp.float32)          # (C, ts, 128) dense tiles
    t = tgt_ref[0, 0]                              # (ts, 128)

    m = x.max(axis=0)                              # (ts, 128) max over classes
    e = jnp.exp(x - m[None, :, :])                 # (C, ts, 128)
    s = e.sum(axis=0)                              # (ts, 128) sum of exp

    # Gather the target-class logit: iota over the class axis, select, reduce.
    cls = jax.lax.broadcasted_iota(jnp.int32, x.shape, 0)
    sel = jnp.where(cls == t[None, :, :], x, 0.0).sum(axis=0)

    loss = m + jnp.log(s) - sel                    # logsumexp(x) - x[target]
    valid = t != ignore_index
    loss_ref[0, 0] = jnp.where(valid, loss, 0.0)


def per_pixel_cross_entropy(logits, target, *, ignore_index=-100,
                            target_block_bytes=8 * 1024 * 1024):
    """Per-pixel cross entropy.

    logits: (N, C, HW) class-major logits (any float dtype; cast to f32 in-register).
    target: (N, HW) integer class indices; loss is 0 where target == ignore_index.
    returns: (N, HW) float32 per-pixel losses.
    """
    N, C, HW = logits.shape
    target = target.astype(jnp.int32)

    # Pad the pixel axis once to a multiple of 128 so (N,C,HW)->(N,C,P,128) is a
    # free contiguous reshape; padded pixels are sliced off the result below.
    hw_pad = pl.cdiv(HW, _LANE) * _LANE
    if hw_pad != HW:
        logits = jnp.pad(logits, ((0, 0), (0, 0), (0, hw_pad - HW)))
        target = jnp.pad(target, ((0, 0), (0, hw_pad - HW)),
                         constant_values=ignore_index)
    P = hw_pad // _LANE
    logits4 = logits.reshape(N, C, P, _LANE)
    target4 = target.reshape(N, 1, P, _LANE)

    itemsize = jnp.dtype(logits.dtype).itemsize
    row_bytes = C * _LANE * itemsize               # logit bytes per 128-pixel row
    ts = max(_SUBLANE, (target_block_bytes // row_bytes) // _SUBLANE * _SUBLANE)
    if ts >= P:
        ts = P                                     # full-extent block is always legal
        if N == 1 and P >= 2 * _SUBLANE:
            # Keep >= 2 pixel tiles so both v7x TensorCores get work when N == 1.
            ts = max(_SUBLANE, (P // 2) // _SUBLANE * _SUBLANE)
    grid = (N, pl.cdiv(P, ts))

    # Double-buffered logits + target + loss blocks with headroom, capped at
    # 48 MiB so it fits v7x's 64 MiB per-core VMEM.
    step_bytes = ts * _LANE * (C * itemsize + 4 + 4)
    vmem_limit = int(min(48 * 1024 * 1024, max(16 * 1024 * 1024, 4 * step_bytes)))

    out = pl.pallas_call(
        functools.partial(_ce_kernel, ignore_index=ignore_index),
        out_shape=jax.ShapeDtypeStruct((N, 1, P, _LANE), jnp.float32),
        grid_spec=pltpu.PrefetchScalarGridSpec(
            num_scalar_prefetch=0,
            grid=grid,
            in_specs=[
                pl.BlockSpec((1, C, ts, _LANE), lambda n, t: (n, 0, t, 0)),
                pl.BlockSpec((1, 1, ts, _LANE), lambda n, t: (n, 0, t, 0)),
            ],
            out_specs=pl.BlockSpec((1, 1, ts, _LANE), lambda n, t: (n, 0, t, 0)),
        ),
        compiler_params=pltpu.CompilerParams(
            dimension_semantics=("parallel", "parallel"),
            vmem_limit_bytes=vmem_limit,
        ),
    )(logits4, target4)
    return out.reshape(N, hw_pad)[:, :HW]


class BootstrappedCE:
    """JAX/Pallas port of the PyTorch BootstrappedCE module (forward only)."""

    def __init__(self, start_warm=20000, end_warm=70000, top_p=0.15,
                 ignore_index=-100, approx_topk=True):
        self.start_warm = start_warm
        self.end_warm = end_warm
        self.top_p = top_p
        self.ignore_index = ignore_index
        # approx_max_k is TPU-native and far cheaper than exact sort-based top_k
        # on multi-megapixel loss maps; set approx_topk=False for exact parity
        # with torch.topk.
        self.approx_topk = approx_topk

    def __call__(self, inp, target, it):
        # inp: (N, C, H, W) logits, target: (N, H, W) int class indices.
        # `it` is a Python int (as in the PyTorch training loop).
        N, C, H, W = inp.shape
        HW = H * W
        logits = inp.reshape(N, C, HW)             # free contiguous reshape
        tgt = target.reshape(N, HW)
        raw_loss = per_pixel_cross_entropy(
            logits, tgt, ignore_index=self.ignore_index).reshape(-1)

        if it < self.start_warm:
            # reduction='mean' averages over non-ignored pixels only.
            # TODO(synk): a per-tile partial-sum output from the kernel would
            # avoid re-reading the loss map from HBM just for this mean.
            n_valid = jnp.maximum(
                jnp.sum(tgt.reshape(-1) != self.ignore_index), 1)
            return raw_loss.sum() / n_valid, 1.0

        num_pixels = raw_loss.shape[0]
        if it > self.end_warm:
            this_p = self.top_p
        else:
            this_p = self.top_p + (1 - self.top_p) * (
                (self.end_warm - it) / (self.end_warm - self.start_warm))
        k = max(1, int(num_pixels * this_p))       # avoid k == 0 -> NaN mean
        if self.approx_topk:
            topk_loss, _ = jax.lax.approx_max_k(raw_loss, k)
        else:
            topk_loss, _ = jax.lax.top_k(raw_loss, k)
        return topk_loss.mean(), this_p


def _reference_ce(logits, target, ignore_index=-100):
    # Pure-JAX per-pixel CE for correctness checking.  logits (N,C,HW), target (N,HW).
    x = logits.astype(jnp.float32)
    lse = jax.nn.logsumexp(x, axis=1)
    t = jnp.clip(target, 0, logits.shape[1] - 1)
    sel = jnp.take_along_axis(x, t[:, None, :], axis=1)[:, 0, :]
    return jnp.where(target == ignore_index, 0.0, lse - sel)


if __name__ == "__main__":
    key = jax.random.PRNGKey(0)
    k1, k2 = jax.random.split(key)

    N, C, H, W = 2, 4, 16, 16
    x = jax.random.normal(k1, (N, C, H, W), dtype=jnp.float32)
    target = jax.random.randint(k2, (N, H, W), 0, C, dtype=jnp.int32)

    # Kernel vs pure-JAX reference (including some ignore_index pixels).
    tgt_ign = target.reshape(N, H * W).at[:, ::7].set(-100)
    got = per_pixel_cross_entropy(x.reshape(N, C, H * W), tgt_ign)
    ref = _reference_ce(x.reshape(N, C, H * W), tgt_ign)
    assert jnp.allclose(got, ref, atol=1e-4, rtol=1e-4), "CE kernel mismatch"

    # Non-multiple-of-128 pixel count + bf16 logits (v5e-friendly input dtype).
    Hb, Wb = 10, 13
    xb = jax.random.normal(k1, (1, C, Hb, Wb), dtype=jnp.bfloat16)
    tb = jax.random.randint(k2, (1, Hb, Wb), 0, C, dtype=jnp.int32)
    got_b = per_pixel_cross_entropy(xb.reshape(1, C, Hb * Wb),
                                    tb.reshape(1, Hb * Wb))
    ref_b = _reference_ce(xb.reshape(1, C, Hb * Wb).astype(jnp.float32),
                          tb.reshape(1, Hb * Wb))
    assert jnp.allclose(got_b, ref_b, atol=1e-3, rtol=1e-3), "bf16/tail CE mismatch"

    bce = BootstrappedCE(start_warm=20000, end_warm=70000, top_p=0.15)

    loss_warm, p_warm = bce(x, target, it=100)        # warm: mean CE, p == 1.0
    loss_boot, p_boot = bce(x, target, it=45000)      # interpolated top-p
    loss_late, p_late = bce(x, target, it=100000)     # fixed top_p
    jax.block_until_ready((loss_warm, loss_boot, loss_late))

    print("KERNEL_OK")
</pallas_src>

<mosaic_0001>
module attributes {stable_mosaic.version = 11 : i64} {
  func.func @_ce_kernel(%arg0: i32, %arg1: i32, %arg2: memref<1x4x2x128xf32, #tpu.memory_space<vmem>>, %arg3: memref<1x1x2x128xi32, #tpu.memory_space<vmem>>, %arg4: memref<1x1x2x128xf32, #tpu.memory_space<vmem>>) attributes {dimension_semantics = [#tpu.dimension_semantics<parallel>, #tpu.dimension_semantics<parallel>], iteration_bounds = array<i64: 2, 1>, scalar_prefetch = 0 : i64, scratch_operands = 0 : i64, tpu.core_type = #tpu.core_type<tc>, window_params = [{transform_indices = @transform_0, window_bounds = array<i64: 1, 4, 2, 128>}, {transform_indices = @transform_1, window_bounds = array<i64: 1, 1, 2, 128>}, {transform_indices = @transform_2, window_bounds = array<i64: 1, 1, 2, 128>}]} {
    %c0 = arith.constant 0 : index
    %c0_0 = arith.constant 0 : index
    %c0_1 = arith.constant 0 : index
    %c0_2 = arith.constant 0 : index
    %0 = vector.load %arg2[%c0, %c0_0, %c0_1, %c0_2] : memref<1x4x2x128xf32, #tpu.memory_space<vmem>>, vector<1x4x2x128xf32>
    %1 = vector.shape_cast %0 : vector<1x4x2x128xf32> to vector<4x2x128xf32>
    %c0_3 = arith.constant 0 : index
    %c0_4 = arith.constant 0 : index
    %c0_5 = arith.constant 0 : index
    %c0_6 = arith.constant 0 : index
    %2 = vector.load %arg3[%c0_3, %c0_4, %c0_5, %c0_6] : memref<1x1x2x128xi32, #tpu.memory_space<vmem>>, vector<1x1x2x128xi32>
    %3 = vector.shape_cast %2 : vector<1x1x2x128xi32> to vector<2x128xi32>
    %cst = arith.constant dense<0xFF800000> : vector<2x128xf32>
    %4 = vector.multi_reduction <maximumf>, %1, %cst [0] : vector<4x2x128xf32> to vector<2x128xf32>
    %5 = vector.shape_cast %4 : vector<2x128xf32> to vector<1x2x128xf32>
    %6 = vector.broadcast %5 : vector<1x2x128xf32> to vector<4x2x128xf32>
    %7 = arith.subf %1, %6 : vector<4x2x128xf32>
    %8 = math.exp %7 : vector<4x2x128xf32>
    %cst_7 = arith.constant dense<0.000000e+00> : vector<2x128xf32>
    %9 = vector.multi_reduction <add>, %8, %cst_7 [0] : vector<4x2x128xf32> to vector<2x128xf32>
    %10 = tpu.iota {dimensions = array<i32: 0>} : vector<4x2x128xi32>
    %11 = vector.shape_cast %3 : vector<2x128xi32> to vector<1x2x128xi32>
    %12 = vector.broadcast %11 : vector<1x2x128xi32> to vector<4x2x128xi32>
    %13 = arith.cmpi eq, %10, %12 : vector<4x2x128xi32>
    %cst_8 = arith.constant 0.000000e+00 : f32
    %14 = vector.broadcast %cst_8 : f32 to vector<4x2x128xf32>
    %15 = arith.select %13, %1, %14 : vector<4x2x128xi1>, vector<4x2x128xf32>
    %cst_9 = arith.constant dense<0.000000e+00> : vector<2x128xf32>
    %16 = vector.multi_reduction <add>, %15, %cst_9 [0] : vector<4x2x128xf32> to vector<2x128xf32>
    %17 = math.log %9 : vector<2x128xf32>
    %18 = arith.addf %4, %17 : vector<2x128xf32>
    %19 = arith.subf %18, %16 : vector<2x128xf32>
    %c-100_i32 = arith.constant -100 : i32
    %20 = vector.broadcast %c-100_i32 : i32 to vector<2x128xi32>
    %21 = arith.cmpi ne, %3, %20 : vector<2x128xi32>
    %cst_10 = arith.constant 0.000000e+00 : f32
    %22 = vector.broadcast %cst_10 : f32 to vector<2x128xf32>
    %23 = arith.select %21, %19, %22 : vector<2x128xi1>, vector<2x128xf32>
    %c0_11 = arith.constant 0 : index
    %c0_12 = arith.constant 0 : index
    %c0_13 = arith.constant 0 : index
    %c0_14 = arith.constant 0 : index
    %24 = vector.load %arg4[%c0_11, %c0_12, %c0_13, %c0_14] : memref<1x1x2x128xf32, #tpu.memory_space<vmem>>, vector<1x1x2x128xf32>
    %25 = vector.shape_cast %24 : vector<1x1x2x128xf32> to vector<2x128xf32>
    %26 = vector.shape_cast %23 : vector<2x128xf32> to vector<1x1x2x128xf32>
    tpu.vector_store %arg4[%c0_11, %c0_12, %c0_13, %c0_14], %26 {strides = array<i32>} : memref<1x1x2x128xf32, #tpu.memory_space<vmem>>, vector<1x1x2x128xf32>,
    return
  }
  func.func @transform_0(%arg0: i32, %arg1: i32) -> (i32, i32, i32, i32) {
    %c0_i32 = arith.constant 0 : i32
    %c0_i32_0 = arith.constant 0 : i32
    %c0_i32_1 = arith.constant 0 : i32
    return %arg0, %c0_i32, %arg1, %c0_i32_0 : i32, i32, i32, i32
  }
  func.func @transform_1(%arg0: i32, %arg1: i32) -> (i32, i32, i32, i32) {
    %c0_i32 = arith.constant 0 : i32
    %c0_i32_0 = arith.constant 0 : i32
    %c0_i32_1 = arith.constant 0 : i32
    return %arg0, %c0_i32, %arg1, %c0_i32_0 : i32, i32, i32, i32
  }
  func.func @transform_2(%arg0: i32, %arg1: i32) -> (i32, i32, i32, i32) {
    %c0_i32 = arith.constant 0 : i32
    %c0_i32_0 = arith.constant 0 : i32
    %c0_i32_1 = arith.constant 0 : i32
    return %arg0, %c0_i32, %arg1, %c0_i32_0 : i32, i32, i32, i32
  }
}

</mosaic_0001>

<llo_original>
// kernel: tpu_custom_call.1
$region0: #{tpu_custom_call.1}
  #allocation0 [shape = 'u32[]', space=smem, size = 0x4, offset = 0x4, fixed_abs, tag = 'smem constant byte address 0x4 - core index']
  #allocation1 [shape = 'u32[144,128]{1,0:T(1,128)}', space=vmem, size = 0x12000, scoped, tag = 'internal scratch']
  %s0 = inlined_call_operand.hbm [shape: f32[2,4,2,128], index: 0, kind: input, shape index: {}]
  %s1 = inlined_call_operand.hbm [shape: s32[2,1,2,128], index: 1, kind: input, shape index: {}]
  %s2 = inlined_call_operand.hbm [shape: f32[2,1,2,128], index: 2, kind: output, shape index: {}]
  %s3 = sld [smem:[#allocation0]]
  $region49: #{tpu_custom_call.1} parent=0
    _
  %s5 = ssub.s32 1, %s3
  %s6 = scalar_select 0, %s5, %s3
  $region1: #{tpu_custom_call.1} parent=0
    #allocation2 [shape = 'u8[8192]{0}', space=vmem, size = 0x2000, scoped, tag = 'input window, operand 0']
    #allocation3 [shape = 's32[2]{0}', space=sflag, size = 0x8, scoped, tag = 'scoped memory for tpu_custom_call.1']
    #allocation4 [shape = 's32[2]{0}', space=sflag, size = 0x8, scoped, tag = 'scoped memory for tpu_custom_call.1']
    #allocation5 [shape = 'u8[2048]{0}', space=vmem, size = 0x800, scoped, tag = 'input window, operand 1']
    #allocation6 [shape = 's32[2]{0}', space=sflag, size = 0x8, scoped, tag = 'scoped memory for tpu_custom_call.1']
    #allocation7 [shape = 'u8[2048]{0}', space=vmem, size = 0x800, scoped, tag = 'output window, operand 0']
    %7 = vsyncpa [#allocation3], 0
    %s8 = scalar_lea.sflag [#allocation3], 1
    %9 = vsyncpa %s8, 0
    %10 = vsyncpa [#allocation6], 0
    %s11 = scalar_lea.sflag [#allocation6], 1
    %12 = vsyncpa %s11, 0
    %13 = vsyncpa [#allocation4], 0
    %s14 = scalar_lea.sflag [#allocation4], 1
    %15 = vsyncpa %s14, 0
    loop: start=0, step=1, limit=4
    $region2: #{tpu_custom_call.1} parent=1 // loop_pre_header
      _
    $region3: #{tpu_custom_call.1} parent=1 // loop_header
      %s17 = sphi 0, %s21
      %p18 = scmp.ge.s32.totalorder %s17, 4
      %s24 = sphi 0, %s36
      %s25 = sphi 0, %s32
      %s26 = sphi 0, %s24
      %s27 = sphi 0, %s25
      %s28 = sphi 0, %s26
      %s29 = sphi 0, %s27
      %s41 = sphi 0, %s43
      %s44 = sphi 0, %s41
      %s45 = sphi 0, %s44
      %s61 = sphi 0, %s45
      %s69 = sphi 0, %s71
      %s72 = sphi 0, %s69
      %s73 = sphi 0, %s72
      %s89 = sphi 0, %s73
      %s97 = sphi 0, %s99
      %s100 = sphi 0, %s97
      %s101 = sphi 0, %s100
      %s117 = sphi 0, %s101
    $region4: #{tpu_custom_call.1} parent=1 // loop_header_branch
      %20 = sbr.rel (%p18) target = $region8
    $region5: #{tpu_custom_call.1} parent=1 // loop_body
      %s22 = ssub.s32 %s17, 1
      %s23 = ssub.s32 %s17, 2
      %s30 = sadd.s32 1, %s25
      %p31 = scmp.ge.s32.totalorder %s30, 1
      %s32 = scalar_select %p31, 0, %s30
      %s33 = sadd.s32 1, %s24
      %s34 = scalar_select %p31, %s33, %s24
      %p35 = scmp.ge.s32.totalorder %s34, 2
      %s36 = scalar_select %p35, 0, %s34
      %s37 = ssub.s32 %s24, %s36
      %s38 = ssub.s32 %s25, %s32
      %s39 = sor.u32 %s37, %s38
      %p40 = scmp.eq.s32.totalorder %s39, 0
      %s42 = sadd.s32 %s41, 1
      %s43 = scalar_select %p40, %s41, %s42
      %p46 = pneg %p40
      %p47 = scmp.eq.s32.totalorder %s17, 1
      %p48 = por %p46, %p47
      %p49 = scmp.ne.s32.totalorder %s41, %s44
      %p50 = scmp.eq.s32.totalorder %s17, 0
      %p51 = por %p49, %p50
      %p52 = scmp.ne.s32.totalorder %s41, %s44
      %p53 = scmp.eq.s32.totalorder %s22, 1
      %p54 = por %p52, %p53
      %p55 = scmp.ne.s32.totalorder %s44, %s45
      %p56 = scmp.eq.s32.totalorder %s22, 0
      %p57 = por %p55, %p56
      %p58 = scmp.ne.s32.totalorder %s44, %s45
      %p59 = scmp.eq.s32.totalorder %s23, 1
      %p60 = por %p58, %p59
      %p62 = scmp.ne.s32.totalorder %s45, %s61
      %p63 = scmp.eq.s32.totalorder %s23, 0
      %p64 = por %p62, %p63
      %s65 = ssub.s32 %s24, %s36
      %s66 = ssub.s32 %s25, %s32
      %s67 = sor.u32 %s65, %s66
      %p68 = scmp.eq.s32.totalorder %s67, 0
      %s70 = sadd.s32 %s69, 1
      %s71 = scalar_select %p68, %s69, %s70
      %p74 = pneg %p68
      %p75 = scmp.eq.s32.totalorder %s17, 1
      %p76 = por %p74, %p75
      %p77 = scmp.ne.s32.totalorder %s69, %s72
      %p78 = scmp.eq.s32.totalorder %s17, 0
      %p79 = por %p77, %p78
      %p80 = scmp.ne.s32.totalorder %s69, %s72
      %p81 = scmp.eq.s32.totalorder %s22, 1
      %p82 = por %p80, %p81
      %p83 = scmp.ne.s32.totalorder %s72, %s73
      %p84 = scmp.eq.s32.totalorder %s22, 0
      %p85 = por %p83, %p84
      %p86 = scmp.ne.s32.totalorder %s72, %s73
      %p87 = scmp.eq.s32.totalorder %s23, 1
      %p88 = por %p86, %p87
      %p90 = scmp.ne.s32.totalorder %s73, %s89
      %p91 = scmp.eq.s32.totalorder %s23, 0
      %p92 = por %p90, %p91
      %s93 = ssub.s32 %s24, %s36
      %s94 = ssub.s32 %s25, %s32
      %s95 = sor.u32 %s93, %s94
      %p96 = scmp.eq.s32.totalorder %s95, 0
      %s98 = sadd.s32 %s97, 1
      %s99 = scalar_select %p96, %s97, %s98
      %p102 = pneg %p96
      %p103 = scmp.eq.s32.totalorder %s17, 1
      %p104 = por %p102, %p103
      %p105 = scmp.ne.s32.totalorder %s97, %s100
      %p106 = scmp.eq.s32.totalorder %s17, 0
      %p107 = por %p105, %p106
      %p108 = scmp.ne.s32.totalorder %s97, %s100
      %p109 = scmp.eq.s32.totalorder %s22, 1
      %p110 = por %p108, %p109
      %p111 = scmp.ne.s32.totalorder %s100, %s101
      %p112 = scmp.eq.s32.totalorder %s22, 0
      %p113 = por %p111, %p112
      %p114 = scmp.ne.s32.totalorder %s100, %s101
      %p115 = scmp.eq.s32.totalorder %s23, 1
      %p116 = por %p114, %p115
      %p118 = scmp.ne.s32.totalorder %s101, %s117
      %p119 = scmp.eq.s32.totalorder %s23, 0
      %p120 = por %p118, %p119
      %p121 = scmp.le.s32.totalorder 1, %s17
      %p122 = scmp.lt.s32.totalorder %s17, 3
      %p123 = pnand %p121, %p122
      %p124 = pneg %p123
      // Predicated region
      $region9: #{tpu_custom_call.1} parent=5 // pred_check
        _
      $region10: #{tpu_custom_call.1} parent=5 // pred_check_branch
        %126 = sbr.rel (%p123) target = $region12
      $region11: #{tpu_custom_call.1} parent=5 // pred_region
        %s127 = ssub.s32 %s17, 1
      $region12: #{tpu_custom_call.1} parent=5 // pred_fallthru
        _
      %p128 = scmp.lt.s32.totalorder %s17, 2
      // Predicated region
      $region13: #{tpu_custom_call.1} parent=5 // pred_check
        %p129 = pneg %p128
      $region14: #{tpu_custom_call.1} parent=5 // pred_check_branch
        %131 = sbr.rel (%p129) target = $region16
      $region15: #{tpu_custom_call.1} parent=5 // pred_region
        // Predicated region
        $region17: #{tpu_custom_call.1} parent=15 // pred_check
          %p132 = pneg %p51
        $region18: #{tpu_custom_call.1} parent=15 // pred_check_branch
          %134 = sbr.rel (%p132) target = $region20
        $region19: #{tpu_custom_call.1} parent=15 // pred_region
          %s135 = sand.u32 %s41, 1
          %s136 = scalar_lea.sflag [#allocation3], %s135
          %s137 = sand.u32 %s41, 1
          %s138 = smul.addr %s137, 8
          %s139 = scalar_lea.vmem [#allocation2], %s138
          %s141 = ssub.s32 128, 128
          %142 = vsyncadd %s136, %s141
          %s143 = smul.addr %s24, 4
          %s144 = sadd.s32 %s25, %s143
          %s145 = smul.addr %s144, 32
          %s146 = scalar_lea.hbm %s0, %s145
          %s147 = sshll.u32 %s139, 4
          %s148 = int_to_ptr.vmem [resolvable:$true] %s147
          %153 = dma.hbm_to_vmem [thread:$0]  %s146, 128, %s148, %s136, 32, 32, 2
        $region20: #{tpu_custom_call.1} parent=15 // pred_fallthru
          _
        // Predicated region
        $region21: #{tpu_custom_call.1} parent=15 // pred_check
          %p154 = pneg %p79
        $region22: #{tpu_custom_call.1} parent=15 // pred_check_branch
          %156 = sbr.rel (%p154) target = $region24
        $region23: #{tpu_custom_call.1} parent=15 // pred_region
          %s157 = sand.u32 %s69, 1
          %s158 = scalar_lea.sflag [#allocation6], %s157
          %s159 = sand.u32 %s69, 1
          %s160 = smul.addr %s159, 2
          %s161 = scalar_lea.vmem [#allocation5], %s160
          %s163 = ssub.s32 32, 32
          %164 = vsyncadd %s158, %s163
          %s165 = sadd.s32 %s25, %s24
          %s166 = smul.addr %s165, 32
          %s167 = scalar_lea.hbm %s1, %s166
          %s169 = sshll.u32 %s161, 4
          %s170 = int_to_ptr.vmem [resolvable:$true] %s169
          %172 = dma.hbm_to_vmem [thread:$0]  %s167, 32, %s170, %s158
        $region24: #{tpu_custom_call.1} parent=15 // pred_fallthru
          _
      $region16: #{tpu_custom_call.1} parent=5 // pred_fallthru
        _
      %p173 = scmp.le.s32.totalorder 1, %s17
      %p174 = scmp.lt.s32.totalorder %s17, 3
      %p175 = pnand %p173, %p174
      %p176 = pneg %p175
      // Predicated region
      $region25: #{tpu_custom_call.1} parent=5 // pred_check
        _
      $region26: #{tpu_custom_call.1} parent=5 // pred_check_branch
        %178 = sbr.rel (%p175) target = $region28
      $region27: #{tpu_custom_call.1} parent=5 // pred_region
        %s179 = ssub.s32 %s17, 1
        %s180 = sand.u32 %s44, 1
        %s181 = scalar_lea.sflag [#allocation3], %s180
        %s182 = sand.u32 %s44, 1
        %s183 = smul.addr %s182, 8
        %s184 = scalar_lea.vmem [#allocation2], %s183
        // Predicated region
        $region29: #{tpu_custom_call.1} parent=27 // pred_check
          %p185 = pneg %p57
        $region30: #{tpu_custom_call.1} parent=27 // pred_check_branch
          %187 = sbr.rel (%p185) target = $region32
        $region31: #{tpu_custom_call.1} parent=27 // pred_region
          %188 = dma.done %s181, 128
        $region32: #{tpu_custom_call.1} parent=27 // pred_fallthru
          _
        %s189 = sand.u32 %s72, 1
        %s190 = scalar_lea.sflag [#allocation6], %s189
        %s191 = sand.u32 %s72, 1
        %s192 = smul.addr %s191, 2
        %s193 = scalar_lea.vmem [#allocation5], %s192
        // Predicated region
        $region33: #{tpu_custom_call.1} parent=27 // pred_check
          %p194 = pneg %p85
        $region34: #{tpu_custom_call.1} parent=27 // pred_check_branch
          %196 = sbr.rel (%p194) target = $region36
        $region35: #{tpu_custom_call.1} parent=27 // pred_region
          %197 = dma.done %s190, 32
        $region36: #{tpu_custom_call.1} parent=27 // pred_fallthru
          _
        %s198 = sand.u32 %s44, 1
        %s199 = scalar_lea.sflag [#allocation3], %s198
        %s200 = sand.u32 %s44, 1
        %s201 = smul.addr %s200, 8
        %s202 = scalar_lea.vmem [#allocation2], %s201
        %p203 = pneg %p57
        %p204 = pneg %p54
        %s205 = sand.u32 %s72, 1
        %s206 = scalar_lea.sflag [#allocation6], %s205
        %s207 = sand.u32 %s72, 1
        %s208 = smul.addr %s207, 2
        %s209 = scalar_lea.vmem [#allocation5], %s208
        %p210 = pneg %p85
        %p211 = pneg %p82
        %p212 = pneg %p113
        %p213 = pneg %p110
        %s214 = sand.u32 %s100, 1
        %s215 = scalar_lea.sflag [#allocation4], %s214
        %s216 = sand.u32 %s100, 1
        %s217 = smul.addr %s216, 2
        %s218 = scalar_lea.vmem [#allocation7], %s217
        %v219 = vld [vmem:[%s184] sm:$0x3]
        %v220 = vld [vmem:[%s184 + $0x2] sm:$0x3]
        %v221 = vld [vmem:[%s184 + $0x4] sm:$0x3]
        %v222 = vld [vmem:[%s184 + $0x6] sm:$0x3]
        %v223 = vld [vmem:[%s193] sm:$0x3]
        %vm224 = vcmask 1041408
        %v225 = vsel %vm224, %v219, -inf
        %v226 = vsel %vm224, %v220, -inf
        %v227 = vsel %vm224, %v221, -inf
        %v228 = vsel %vm224, %v222, -inf
        %v229 = vmax.f32 %v225, %v226
        %v230 = vmax.f32 %v227, %v228
        %v231 = vmax.f32 %v229, %v230
        %v232 = vsub.f32 %v219, %v231
        %v233 = vsub.f32 %v220, %v231
        %v234 = vsub.f32 %v221, %v231
        %v235 = vsub.f32 %v222, %v231
        %v236 = vmul.f32 %v232, 1.442695
        %v237 = vpow.pop %v236
        %v238 = vmul.f32 %v233, 1.442695
        %v239 = vpow.pop %v238
        %v240 = vmul.f32 %v234, 1.442695
        %v241 = vpow.pop %v240
        %v242 = vmul.f32 %v235, 1.442695
        %v243 = vpow.pop %v242
        %v244 = vsel %vm224, %v237, 0.0
        %v245 = vsel %vm224, %v239, 0.0
        %v246 = vadd.f32 %v244, %v245
        %v247 = vsel %vm224, %v241, 0.0
        %v248 = vadd.f32 %v246, %v247
        %v249 = vsel %vm224, %v243, 0.0
        %v250 = vadd.f32 %v248, %v249
        %vm251 = vcmp.eq.s32.totalorder %v223, 0
        %vm252 = vcmp.eq.s32.totalorder %v223, 1
        %vm253 = vcmp.eq.s32.totalorder %v223, 2
        %vm254 = vcmp.eq.s32.totalorder %v223, 3
        %v255 = vsel %vm251, %v219, 0.0
        %v256 = vsel %vm252, %v220, 0.0
        %v257 = vsel %vm253, %v221, 0.0
        %v258 = vsel %vm254, %v222, 0.0
        %v259 = vsel %vm224, %v255, 0.0
        %v260 = vsel %vm224, %v256, 0.0
        %v261 = vadd.f32 %v259, %v260
        %v262 = vsel %vm224, %v257, 0.0
        %v263 = vadd.f32 %v261, %v262
        %v264 = vsel %vm224, %v258, 0.0
        %v265 = vadd.f32 %v263, %v264
        %v266 = vlog2.pop %v250
        %v267 = vmul.f32 %v266, 0.6931472
        %v268 = vadd.f32 %v231, %v267
        %v269 = vsub.f32 %v268, %v265
        %vm270 = vcmp.ne.s32.totalorder %v223, 4294967196
        %v271 = vsel %vm270, %v269, 0.0
        %272 = vst [vmem:[%s218] sm:$0x3] %v271
        %s273 = sand.u32 %s100, 1
        %s274 = scalar_lea.sflag [#allocation4], %s273
        %s275 = sand.u32 %s100, 1
        %s276 = smul.addr %s275, 2
        %s277 = scalar_lea.vmem [#allocation7], %s276
        // Predicated region
        $region37: #{tpu_custom_call.1} parent=27 // pred_check
          %p278 = pneg %p110
        $region38: #{tpu_custom_call.1} parent=27 // pred_check_branch
          %280 = sbr.rel (%p278) target = $region40
        $region39: #{tpu_custom_call.1} parent=27 // pred_region
          %s282 = ssub.s32 32, 32
          %283 = vsyncadd %s274, %s282
          %s284 = sadd.s32 %s27, %s26
          %s285 = smul.addr %s284, 32
          %s286 = scalar_lea.hbm %s2, %s285
          %s288 = sshll.u32 %s277, 4
          %s289 = int_to_ptr.vmem [resolvable:$true] %s288
          %291 = dma.vmem_to_hbm [thread:$0]  %s289, 32, %s286, %s274
        $region40: #{tpu_custom_call.1} parent=27 // pred_fallthru
          _
      $region28: #{tpu_custom_call.1} parent=5 // pred_fallthru
        _
      %p292 = scmp.le.s32.totalorder 2, %s17
      // Predicated region
      $region41: #{tpu_custom_call.1} parent=5 // pred_check
        %p293 = pneg %p292
      $region42: #{tpu_custom_call.1} parent=5 // pred_check_branch
        %295 = sbr.rel (%p293) target = $region44
      $region43: #{tpu_custom_call.1} parent=5 // pred_region
        %s296 = ssub.s32 %s17, 2
        // Predicated region
        $region45: #{tpu_custom_call.1} parent=43 // pred_check
          %p297 = pneg %p116
        $region46: #{tpu_custom_call.1} parent=43 // pred_check_branch
          %299 = sbr.rel (%p297) target = $region48
        $region47: #{tpu_custom_call.1} parent=43 // pred_region
          %s300 = sand.u32 %s101, 1
          %s301 = scalar_lea.sflag [#allocation4], %s300
          %s302 = sand.u32 %s101, 1
          %s303 = smul.addr %s302, 2
          %s304 = scalar_lea.vmem [#allocation7], %s303
          %305 = dma.done %s301, 32
        $region48: #{tpu_custom_call.1} parent=43 // pred_fallthru
          _
      $region44: #{tpu_custom_call.1} parent=5 // pred_fallthru
        _
    $region6: #{tpu_custom_call.1} parent=1 // loop_footer
      %s21 = sadd.s32 1, %s17
    $region7: #{tpu_custom_call.1} parent=1 // loop_footer_branch
      %16 = sbr.rel target = $region3
    $region8: #{tpu_custom_call.1} parent=1 // loop_exit
      _
    %306 = vsyncpa [#allocation3], 1
    %s307 = scalar_lea.sflag [#allocation3], 1
    %308 = vsyncpa %s307, 1
    %309 = vsyncpa [#allocation6], 1
    %s310 = scalar_lea.sflag [#allocation6], 1
    %311 = vsyncpa %s310, 1
    %312 = vsyncpa [#allocation4], 1
    %s313 = scalar_lea.sflag [#allocation4], 1
    %314 = vsyncpa %s313, 1

</llo_original>
